<compile_context>
chip_gen: v6e
topology: v6e:2x2x1
jax: 0.10.0
libtpu: 0.0.40
codegen_flags: <defaults>
</compile_context>

<pallas_src>
import math
import jax
import jax.numpy as jnp
from jax import lax
from jax.experimental import pallas as pl
from jax.experimental.pallas import tpu as pltpu


# ---------------------------------------------------------------------------
# Model hyper-parameters (small, deterministic)
# ---------------------------------------------------------------------------
EMBED_DIM = 32
NUM_HEADS = 4
HEAD_DIM = EMBED_DIM // NUM_HEADS
TGT_LEN = 8
BSZ = 2
SCALING = HEAD_DIM ** (-0.5)
NEG = -1.0e9          # finite off-block mask value (avoid inf-inf NaN)


# ---------------------------------------------------------------------------
# Pallas kernel: one invocation, everything batched across (b, h).
# Row index convention for the "slab" arrays: r = (b*H + h)*T + t.
# ---------------------------------------------------------------------------
def mha_kernel(x_ref, w_ref, b_ref, bias_ref, csum_ref, msumt_ref, bo_ref,
               out_ref, avgw_ref):
    D, E = HEAD_DIM, EMBED_DIM

    # Fused projection for all batches/heads: (B*H*T, H*E) @ (H*E, 2D+E).
    # Columns: [ q*scaling (D) | k (D) | v @ Wo_head (E) ]  (out-proj folded).
    qkv = jnp.dot(x_ref[...], w_ref[...],
                  preferred_element_type=jnp.float32) + b_ref[...]     # (64, 48)
    q = qkv[:, :D]                      # (B*H*T, D)
    k = qkv[:, D:2 * D]                 # (B*H*T, D)
    vw = qkv[:, 2 * D:]                 # (B*H*T, E)   (already out-projected)

    # Scores for every (b,h) pair in one MXU push; off-block entries are
    # garbage but get masked by the block-diagonal bias below.
    s = lax.dot_general(q, k, (((1,), (1,)), ((), ())),
                        preferred_element_type=jnp.float32)            # (64, 64)
    s = s + bias_ref[...]               # attn_bias on diag blocks, -1e9 off-block

    # One dense, numerically-stable softmax over all rows.
    m = jnp.max(s, axis=-1, keepdims=True)
    e = jnp.exp(s - m)                  # off-block -> exp(~-1e9) == 0.0 exactly
    denom = jnp.sum(e, axis=-1, keepdims=True)
    r = pl.reciprocal(denom, approx=True)        # EUP vrcp
    r = r * (2.0 - denom * r)                    # 1 Newton step -> fp32 accuracy
    p = e * r                                    # (64, 64), block-diagonal

    # Per-head attention output with out-projection already folded in.
    y = jnp.dot(p, vw, preferred_element_type=jnp.float32)             # (64, E)

    # Head merge (sum over h) via a constant summation matrix: (16,64)@(64,32).
    msumt = msumt_ref[...]                                              # (B*T, B*H*T)
    out2d = jnp.dot(msumt, y, preferred_element_type=jnp.float32) + bo_ref[...]
    out_ref[...] = out2d.astype(out_ref.dtype)                          # (B*T, E)

    # Average attention weights: extract each row's own (T,T) block columns
    # (csum has 1/H folded in), then sum over heads with the same msumt.
    pc = jnp.dot(p, csum_ref[...], preferred_element_type=jnp.float32)  # (64, T)
    avgw_ref[...] = jnp.dot(msumt, pc,
                            preferred_element_type=jnp.float32).astype(avgw_ref.dtype)


# ---------------------------------------------------------------------------
# Wrapper: layout plumbing (block-structured x, block-diagonal bias) done in
# XLA on a few KB; kernel sees only lane/sublane-dense 2-D slabs.
# ---------------------------------------------------------------------------
def _build_x_blk(query_tbe):
    """(T,B,E) -> block-structured (B*H*T, H*E): row (b,h,t) holds x[b,t,:] in
    column block h, zeros elsewhere (enables per-head weights in one matmul)."""
    T, B, E = query_tbe.shape
    H = NUM_HEADS
    x_bte = jnp.transpose(query_tbe, (1, 0, 2))                 # (B, T, E)
    eye_h = jnp.eye(H, dtype=query_tbe.dtype)
    x_blk = jnp.einsum('bte,hg->bhtge', x_bte, eye_h)           # (B,H,T,H,E)
    return x_blk.reshape(B * H * T, H * E)


def _build_bias_bd(attn_bias):
    """(B,H,T,T) -> (B*H*T, B*H*T) block-diagonal bias; -1e9 off the blocks."""
    B, H, T, _ = attn_bias.shape
    G = B * H
    blk = attn_bias.reshape(G, T, T)
    eye_g = jnp.eye(G, dtype=attn_bias.dtype)
    on = jnp.einsum('gts,gk->gtks', blk, eye_g).reshape(G * T, G * T)
    block_mask = jnp.kron(eye_g, jnp.ones((T, T), attn_bias.dtype))
    return jnp.where(block_mask > 0, on, jnp.asarray(NEG, attn_bias.dtype))


def multihead_attention(query_tbe, packed_params, attn_bias):
    """query_tbe: (T, B, E) (PyTorch layout). attn_bias: (B, H, T, T).

    Returns (attn (T, B, E), avg_attn_weights (B, T, T)), matching the PyTorch
    module with need_weights=True, need_head_weights=False, dropout=0.
    """
    T, B, E = query_tbe.shape
    H = NUM_HEADS
    w_stack, b_full, bo_row, csum, msum_t = packed_params

    x_blk = _build_x_blk(query_tbe)            # (B*H*T, H*E)   = (64, 128)
    bias_bd = _build_bias_bd(attn_bias)        # (B*H*T, B*H*T) = (64, 64)

    full2 = lambda shp: pl.BlockSpec(shp, lambda i: (0, 0))
    in_specs = [
        full2(x_blk.shape),       # block-structured activations
        full2(w_stack.shape),     # per-head stacked [Wq*s | Wk | Wv@Wo]
        full2(b_full.shape),      # per-row (per-head) projection bias
        full2(bias_bd.shape),     # block-diagonal attention bias
        full2(csum.shape),        # block-column extractor (1/H folded)
        full2(msum_t.shape),      # head-sum matrix
        full2(bo_row.shape),      # output-projection bias
    ]
    out_shapes = (
        jax.ShapeDtypeStruct((B * T, E), jnp.float32),
        jax.ShapeDtypeStruct((B * T, T), jnp.float32),
    )
    out_specs = (full2((B * T, E)), full2((B * T, T)))

    out2d, avgw2d = pl.pallas_call(
        mha_kernel,
        out_shape=out_shapes,
        grid=(1,),
        in_specs=in_specs,
        out_specs=out_specs,
        compiler_params=pltpu.CompilerParams(
            dimension_semantics=("arbitrary",)),
    )(x_blk, w_stack, b_full, bias_bd, csum, msum_t, bo_row)

    attn = out2d.reshape(B, T, E).transpose(1, 0, 2)     # (T, B, E)
    avg_w = avgw2d.reshape(B, T, T)                      # (B, T, T)
    return attn, avg_w


# ---------------------------------------------------------------------------
# Deterministic parameter init (xavier_uniform, like reset_parameters)
# ---------------------------------------------------------------------------
def xavier_uniform(key, shape, gain=1.0):
    fan_in, fan_out = shape[1], shape[0]   # torch weight shape (out, in)
    bound = gain * math.sqrt(6.0 / (fan_in + fan_out))
    return jax.random.uniform(key, shape, jnp.float32, -bound, bound)


def init_params(key):
    """Raw torch-convention params: W is (out, in), b is (out,)."""
    ks = jax.random.split(key, 8)
    g = 1.0 / math.sqrt(2.0)
    wq = xavier_uniform(ks[0], (EMBED_DIM, EMBED_DIM), g)
    wk = xavier_uniform(ks[1], (EMBED_DIM, EMBED_DIM), g)
    wv = xavier_uniform(ks[2], (EMBED_DIM, EMBED_DIM), g)
    wo = xavier_uniform(ks[3], (EMBED_DIM, EMBED_DIM), 1.0)
    bq = 0.01 * jax.random.normal(ks[4], (EMBED_DIM,), jnp.float32)
    bk = 0.01 * jax.random.normal(ks[5], (EMBED_DIM,), jnp.float32)
    bv = 0.01 * jax.random.normal(ks[6], (EMBED_DIM,), jnp.float32)
    bo = jnp.zeros((EMBED_DIM,), jnp.float32)
    return wq, bq, wk, bk, wv, bv, wo, bo


def pack_params(raw):
    """One-off packing: fold SCALING into q, fold Wo into v per head, stack the
    per-head weight blocks for the block-structured activation matmul, and
    pre-build the constant summation matrices."""
    wq, bq, wk, bk, wv, bv, wo, bo = raw
    E, H, D, B, T = EMBED_DIM, NUM_HEADS, HEAD_DIM, BSZ, TGT_LEN
    wq_t = wq.T * SCALING
    wk_t = wk.T
    wv_t = wv.T
    wo_t = wo.T                                            # (E_in_per_head, E_out)

    w_blocks, b_blocks = [], []
    for h in range(H):
        sl = slice(h * D, (h + 1) * D)
        wvwo_h = wv_t[:, sl] @ wo_t[sl, :]                 # (E, E): v-proj @ out-proj
        w_blocks.append(jnp.concatenate([wq_t[:, sl], wk_t[:, sl], wvwo_h], axis=1))
        b_blocks.append(jnp.concatenate([bq[sl] * SCALING, bk[sl], bv[sl] @ wo_t[sl, :]]))
    w_stack = jnp.concatenate(w_blocks, axis=0)            # (H*E, 2D+E) = (128, 48)

    b_rows = jnp.stack(b_blocks, axis=0)                   # (H, 2D+E)
    b_full = jnp.broadcast_to(b_rows[None, :, None, :],
                              (B, H, T, 2 * D + E)).reshape(B * H * T, 2 * D + E)

    # csum[(g,t'), j] = 1/H if t' == j  -> picks each row's own block columns.
    csum = jnp.tile(jnp.eye(T, dtype=jnp.float32), (B * H, 1)) * (1.0 / H)   # (B*H*T, T)
    # msum_t[(b,t), (b',h',t')] = 1 if b'==b and t'==t  -> sums over heads.
    msum_t = jnp.kron(jnp.eye(B, dtype=jnp.float32),
                      jnp.kron(jnp.ones((1, H), jnp.float32),
                               jnp.eye(T, dtype=jnp.float32)))               # (B*T, B*H*T)

    return w_stack, b_full, bo[None, :], csum, msum_t


# ---------------------------------------------------------------------------
# Pure-JAX reference (mirrors the PyTorch forward exactly)
# ---------------------------------------------------------------------------
def reference(query_tbe, raw, attn_bias):
    T, B, E = query_tbe.shape
    wq, bq, wk, bk, wv, bv, wo, bo = raw
    x = query_tbe                                   # (T, B, E)
    q = (x @ wq.T + bq) * SCALING
    k = x @ wk.T + bk
    v = x @ wv.T + bv

    def split_heads(t):  # (T, B, E) -> (B*H, T, D)
        return t.reshape(T, B * NUM_HEADS, HEAD_DIM).transpose(1, 0, 2)

    qh, kh, vh = split_heads(q), split_heads(k), split_heads(v)
    s = jnp.einsum('ntd,nsd->nts', qh, kh)                      # (B*H, T, T)
    s = s + attn_bias.reshape(B * NUM_HEADS, T, T)
    p = jax.nn.softmax(s, axis=-1)
    attn = jnp.einsum('nts,nsd->ntd', p, vh)                    # (B*H, T, D)
    attn = attn.transpose(1, 0, 2).reshape(T, B, E)
    attn = attn @ wo.T + bo
    avg_w = p.reshape(B, NUM_HEADS, T, T).mean(axis=1)
    return attn, avg_w


if __name__ == "__main__":
    key = jax.random.PRNGKey(0)
    k_p, k_x, k_b = jax.random.split(key, 3)

    raw_params = init_params(k_p)
    packed = pack_params(raw_params)
    query = jax.random.normal(k_x, (TGT_LEN, BSZ, EMBED_DIM), jnp.float32)
    attn_bias = 0.1 * jax.random.normal(
        k_b, (BSZ, NUM_HEADS, TGT_LEN, TGT_LEN), jnp.float32)

    attn_out, attn_w = multihead_attention(query, packed, attn_bias)
    jax.block_until_ready((attn_out, attn_w))

    ref_out, ref_w = reference(query, raw_params, attn_bias)
    assert attn_out.shape == (TGT_LEN, BSZ, EMBED_DIM)
    assert attn_w.shape == (BSZ, TGT_LEN, TGT_LEN)
    assert jnp.allclose(attn_out, ref_out, atol=1e-4, rtol=1e-4), "attn mismatch"
    assert jnp.allclose(attn_w, ref_w, atol=1e-4, rtol=1e-4), "weights mismatch"

    # TODO(synk): dropout_module / key_padding_mask / attn_mask / before_softmax
    # branches are not exercised in this forward path (dropout=0, masks=None).

    print("KERNEL_OK")
</pallas_src>

<mosaic_0001>
module attributes {stable_mosaic.version = 11 : i64} {
  func.func @mha_kernel(%arg0: i32, %arg1: memref<64x128xf32, #tpu.memory_space<vmem>>, %arg2: memref<128x48xf32, #tpu.memory_space<vmem>>, %arg3: memref<64x48xf32, #tpu.memory_space<vmem>>, %arg4: memref<64x64xf32, #tpu.memory_space<vmem>>, %arg5: memref<64x8xf32, #tpu.memory_space<vmem>>, %arg6: memref<16x64xf32, #tpu.memory_space<vmem>>, %arg7: memref<1x32xf32, #tpu.memory_space<vmem>>, %arg8: memref<16x32xf32, #tpu.memory_space<vmem>>, %arg9: memref<16x8xf32, #tpu.memory_space<vmem>>) attributes {dimension_semantics = [#tpu.dimension_semantics<arbitrary>], iteration_bounds = array<i64: 1>, scalar_prefetch = 0 : i64, scratch_operands = 0 : i64, tpu.core_type = #tpu.core_type<tc>, window_params = [{pipeline_mode = #tpu.pipeline_mode<synchronous>, transform_indices = @transform_0, window_bounds = array<i64: 64, 128>}, {pipeline_mode = #tpu.pipeline_mode<synchronous>, transform_indices = @transform_1, window_bounds = array<i64: 128, 48>}, {pipeline_mode = #tpu.pipeline_mode<synchronous>, transform_indices = @transform_2, window_bounds = array<i64: 64, 48>}, {pipeline_mode = #tpu.pipeline_mode<synchronous>, transform_indices = @transform_3, window_bounds = array<i64: 64, 64>}, {pipeline_mode = #tpu.pipeline_mode<synchronous>, transform_indices = @transform_4, window_bounds = array<i64: 64, 8>}, {pipeline_mode = #tpu.pipeline_mode<synchronous>, transform_indices = @transform_5, window_bounds = array<i64: 16, 64>}, {pipeline_mode = #tpu.pipeline_mode<synchronous>, transform_indices = @transform_6, window_bounds = array<i64: 1, 32>}, {pipeline_mode = #tpu.pipeline_mode<synchronous>, transform_indices = @transform_7, window_bounds = array<i64: 16, 32>}, {pipeline_mode = #tpu.pipeline_mode<synchronous>, transform_indices = @transform_8, window_bounds = array<i64: 16, 8>}]} {
    %c0 = arith.constant 0 : index
    %c0_0 = arith.constant 0 : index
    %0 = vector.load %arg1[%c0, %c0_0] : memref<64x128xf32, #tpu.memory_space<vmem>>, vector<64x128xf32>
    %c0_1 = arith.constant 0 : index
    %c0_2 = arith.constant 0 : index
    %1 = vector.load %arg2[%c0_1, %c0_2] : memref<128x48xf32, #tpu.memory_space<vmem>>, vector<128x48xf32>
    %cst = arith.constant dense<0.000000e+00> : vector<64x48xf32>
    %2 = tpu.matmul %0, %1, %cst {dimension_numbers = #tpu.dot_dimension_numbers<[1], [0], [0], [1], [0, 0, 1, 1], [], []>} : vector<64x128xf32>, vector<128x48xf32>, vector<64x48xf32> -> vector<64x48xf32>
    %c0_3 = arith.constant 0 : index
    %c0_4 = arith.constant 0 : index
    %3 = vector.load %arg3[%c0_3, %c0_4] : memref<64x48xf32, #tpu.memory_space<vmem>>, vector<64x48xf32>
    %4 = arith.addf %2, %3 : vector<64x48xf32>
    %5 = vector.extract_strided_slice %4 {offsets = [0, 0], sizes = [64, 8], strides = [1, 1]} : vector<64x48xf32> to vector<64x8xf32>
    %6 = vector.extract_strided_slice %4 {offsets = [0, 8], sizes = [64, 8], strides = [1, 1]} : vector<64x48xf32> to vector<64x8xf32>
    %7 = vector.extract_strided_slice %4 {offsets = [0, 16], sizes = [64, 32], strides = [1, 1]} : vector<64x48xf32> to vector<64x32xf32>
    %cst_5 = arith.constant dense<0.000000e+00> : vector<64x64xf32>
    %8 = tpu.matmul %5, %6, %cst_5 {dimension_numbers = #tpu.dot_dimension_numbers<[1], [1], [0], [0], [0, 0, 1, 0], [], []>} : vector<64x8xf32>, vector<64x8xf32>, vector<64x64xf32> -> vector<64x64xf32>
    %c0_6 = arith.constant 0 : index
    %c0_7 = arith.constant 0 : index
    %9 = vector.load %arg4[%c0_6, %c0_7] : memref<64x64xf32, #tpu.memory_space<vmem>>, vector<64x64xf32>
    %10 = arith.addf %8, %9 : vector<64x64xf32>
    %cst_8 = arith.constant dense<0xFF800000> : vector<64xf32>
    %11 = vector.multi_reduction <maximumf>, %10, %cst_8 [1] : vector<64x64xf32> to vector<64xf32>
    %12 = vector.shape_cast %11 : vector<64xf32> to vector<64x1xf32>
    %13 = vector.broadcast %12 : vector<64x1xf32> to vector<64x64xf32>
    %14 = arith.subf %10, %13 : vector<64x64xf32>
    %15 = math.exp %14 : vector<64x64xf32>
    %cst_9 = arith.constant dense<0.000000e+00> : vector<64xf32>
    %16 = vector.multi_reduction <add>, %15, %cst_9 [1] : vector<64x64xf32> to vector<64xf32>
    %17 = vector.shape_cast %16 : vector<64xf32> to vector<64x1xf32>
    %18 = tpu.reciprocal %17 {approx = true} : vector<64x1xf32> -> vector<64x1xf32>
    %19 = arith.mulf %17, %18 : vector<64x1xf32>
    %cst_10 = arith.constant 2.000000e+00 : f32
    %20 = vector.broadcast %cst_10 : f32 to vector<64x1xf32>
    %21 = arith.subf %20, %19 : vector<64x1xf32>
    %22 = arith.mulf %18, %21 : vector<64x1xf32>
    %23 = vector.broadcast %22 : vector<64x1xf32> to vector<64x64xf32>
    %24 = arith.mulf %15, %23 : vector<64x64xf32>
    %cst_11 = arith.constant dense<0.000000e+00> : vector<64x32xf32>
    %25 = tpu.matmul %24, %7, %cst_11 {dimension_numbers = #tpu.dot_dimension_numbers<[1], [0], [0], [1], [0, 0, 1, 1], [], []>} : vector<64x64xf32>, vector<64x32xf32>, vector<64x32xf32> -> vector<64x32xf32>
    %c0_12 = arith.constant 0 : index
    %c0_13 = arith.constant 0 : index
    %26 = vector.load %arg6[%c0_12, %c0_13] : memref<16x64xf32, #tpu.memory_space<vmem>>, vector<16x64xf32>
    %cst_14 = arith.constant dense<0.000000e+00> : vector<16x32xf32>
    %27 = tpu.matmul %26, %25, %cst_14 {dimension_numbers = #tpu.dot_dimension_numbers<[1], [0], [0], [1], [0, 0, 1, 1], [], []>} : vector<16x64xf32>, vector<64x32xf32>, vector<16x32xf32> -> vector<16x32xf32>
    %c0_15 = arith.constant 0 : index
    %c0_16 = arith.constant 0 : index
    %28 = vector.load %arg7[%c0_15, %c0_16] : memref<1x32xf32, #tpu.memory_space<vmem>>, vector<1x32xf32>
    %29 = vector.broadcast %28 : vector<1x32xf32> to vector<16x32xf32>
    %30 = arith.addf %27, %29 : vector<16x32xf32>
    %c0_17 = arith.constant 0 : index
    %c0_18 = arith.constant 0 : index
    %31 = vector.load %arg8[%c0_17, %c0_18] : memref<16x32xf32, #tpu.memory_space<vmem>>, vector<16x32xf32>
    tpu.vector_store %arg8[%c0_17, %c0_18], %30 {strides = array<i32>} : memref<16x32xf32, #tpu.memory_space<vmem>>, vector<16x32xf32>,
    %c0_19 = arith.constant 0 : index
    %c0_20 = arith.constant 0 : index
    %32 = vector.load %arg5[%c0_19, %c0_20] : memref<64x8xf32, #tpu.memory_space<vmem>>, vector<64x8xf32>
    %cst_21 = arith.constant dense<0.000000e+00> : vector<64x8xf32>
    %33 = tpu.matmul %24, %32, %cst_21 {dimension_numbers = #tpu.dot_dimension_numbers<[1], [0], [0], [1], [0, 0, 1, 1], [], []>} : vector<64x64xf32>, vector<64x8xf32>, vector<64x8xf32> -> vector<64x8xf32>
    %cst_22 = arith.constant dense<0.000000e+00> : vector<16x8xf32>
    %34 = tpu.matmul %26, %33, %cst_22 {dimension_numbers = #tpu.dot_dimension_numbers<[1], [0], [0], [1], [0, 0, 1, 1], [], []>} : vector<16x64xf32>, vector<64x8xf32>, vector<16x8xf32> -> vector<16x8xf32>
    %c0_23 = arith.constant 0 : index
    %c0_24 = arith.constant 0 : index
    %35 = vector.load %arg9[%c0_23, %c0_24] : memref<16x8xf32, #tpu.memory_space<vmem>>, vector<16x8xf32>
    tpu.vector_store %arg9[%c0_23, %c0_24], %34 {strides = array<i32>} : memref<16x8xf32, #tpu.memory_space<vmem>>, vector<16x8xf32>,
    return
  }
  func.func @transform_0(%arg0: i32) -> (i32, i32) {
    %c0_i32 = arith.constant 0 : i32
    %c0_i32_0 = arith.constant 0 : i32
    %c0_i32_1 = arith.constant 0 : i32
    return %c0_i32, %c0_i32_0 : i32, i32
  }
  func.func @transform_1(%arg0: i32) -> (i32, i32) {
    %c0_i32 = arith.constant 0 : i32
    %c0_i32_0 = arith.constant 0 : i32
    %c0_i32_1 = arith.constant 0 : i32
    return %c0_i32, %c0_i32_0 : i32, i32
  }
  func.func @transform_2(%arg0: i32) -> (i32, i32) {
    %c0_i32 = arith.constant 0 : i32
    %c0_i32_0 = arith.constant 0 : i32
    %c0_i32_1 = arith.constant 0 : i32
    return %c0_i32, %c0_i32_0 : i32, i32
  }
  func.func @transform_3(%arg0: i32) -> (i32, i32) {
    %c0_i32 = arith.constant 0 : i32
    %c0_i32_0 = arith.constant 0 : i32
    %c0_i32_1 = arith.constant 0 : i32
    return %c0_i32, %c0_i32_0 : i32, i32
  }
  func.func @transform_4(%arg0: i32) -> (i32, i32) {
    %c0_i32 = arith.constant 0 : i32
    %c0_i32_0 = arith.constant 0 : i32
    %c0_i32_1 = arith.constant 0 : i32
    return %c0_i32, %c0_i32_0 : i32, i32
  }
  func.func @transform_5(%arg0: i32) -> (i32, i32) {
    %c0_i32 = arith.constant 0 : i32
    %c0_i32_0 = arith.constant 0 : i32
    %c0_i32_1 = arith.constant 0 : i32
    return %c0_i32, %c0_i32_0 : i32, i32
  }
  func.func @transform_6(%arg0: i32) -> (i32, i32) {
    %c0_i32 = arith.constant 0 : i32
    %c0_i32_0 = arith.constant 0 : i32
    %c0_i32_1 = arith.constant 0 : i32
    return %c0_i32, %c0_i32_0 : i32, i32
  }
  func.func @transform_7(%arg0: i32) -> (i32, i32) {
    %c0_i32 = arith.constant 0 : i32
    %c0_i32_0 = arith.constant 0 : i32
    %c0_i32_1 = arith.constant 0 : i32
    return %c0_i32, %c0_i32_0 : i32, i32
  }
  func.func @transform_8(%arg0: i32) -> (i32, i32) {
    %c0_i32 = arith.constant 0 : i32
    %c0_i32_0 = arith.constant 0 : i32
    %c0_i32_1 = arith.constant 0 : i32
    return %c0_i32, %c0_i32_0 : i32, i32
  }
}

</mosaic_0001>

<llo_original>
// kernel: tpu_custom_call.1
$region0: #{tpu_custom_call.1}
  #allocation0 [shape = 'u32[]', space=smem, size = 0x4, offset = 0x4, fixed_abs, tag = 'smem constant byte address 0x4 - core index']
  #allocation1 [shape = 'u32[144,128]{1,0:T(1,128)}', space=vmem, size = 0x12000, scoped, tag = 'internal scratch']
  %s0 = inlined_call_operand.vmem [shape: f32[64,128], index: 0, kind: input, shape index: {}]
  %s1 = inlined_call_operand.vmem [shape: f32[128,48], index: 1, kind: input, shape index: {}]
  %s2 = inlined_call_operand.vmem [shape: f32[64,48], index: 2, kind: input, shape index: {}]
  %s3 = inlined_call_operand.vmem [shape: f32[64,64], index: 3, kind: input, shape index: {}]
  %s4 = inlined_call_operand.vmem [shape: f32[64,8], index: 4, kind: input, shape index: {}]
  %s5 = inlined_call_operand.vmem [shape: f32[16,64], index: 5, kind: input, shape index: {}]
  %s6 = inlined_call_operand.vmem [shape: f32[1,32], index: 6, kind: input, shape index: {}]
  %s7 = inlined_call_operand.hbm [shape: f32[16,32], index: 7, kind: output, shape index: {0}]
  %s8 = inlined_call_operand.vmem [shape: f32[16,8], index: 8, kind: output, shape index: {1}]
  %9 = xla_tuple %s7, %s8
  %s10 = sld [smem:[#allocation0]]
  $region46: #{tpu_custom_call.1} parent=0
    _
  %s12 = ssub.s32 1, %s10
  %s13 = scalar_select 0, %s12, %s10
  $region1: #{tpu_custom_call.1} parent=0
    #allocation2 [shape = 'u8[8192]{0}', space=vmem, size = 0x2000, scoped, tag = 'output window, operand 0, single buffered']
    #allocation3 [shape = 's32[1]{0}', space=sflag, size = 0x4, scoped, tag = 'scoped memory for tpu_custom_call.1']
    %14 = vsyncpa [#allocation3], 0
    // Predicated region
    $region2: #{tpu_custom_call.1} parent=1 // pred_check
      _
    $region3: #{tpu_custom_call.1} parent=1 // pred_check_branch
      %16 = sbr.rel (0) target = $region5
    $region4: #{tpu_custom_call.1} parent=1 // pred_region
      _
    $region5: #{tpu_custom_call.1} parent=1 // pred_fallthru
      _
    // Predicated region
    $region6: #{tpu_custom_call.1} parent=1 // pred_check
      _
    $region7: #{tpu_custom_call.1} parent=1 // pred_check_branch
      %18 = sbr.rel (0) target = $region9
    $region8: #{tpu_custom_call.1} parent=1 // pred_region
      _
    $region9: #{tpu_custom_call.1} parent=1 // pred_fallthru
      _
    // Predicated region
    $region10: #{tpu_custom_call.1} parent=1 // pred_check
      _
    $region11: #{tpu_custom_call.1} parent=1 // pred_check_branch
      %20 = sbr.rel (0) target = $region13
    $region12: #{tpu_custom_call.1} parent=1 // pred_region
      _
    $region13: #{tpu_custom_call.1} parent=1 // pred_fallthru
      _
    // Predicated region
    $region14: #{tpu_custom_call.1} parent=1 // pred_check
      _
    $region15: #{tpu_custom_call.1} parent=1 // pred_check_branch
      %22 = sbr.rel (0) target = $region17
    $region16: #{tpu_custom_call.1} parent=1 // pred_region
      _
    $region17: #{tpu_custom_call.1} parent=1 // pred_fallthru
      _
    // Predicated region
    $region18: #{tpu_custom_call.1} parent=1 // pred_check
      _
    $region19: #{tpu_custom_call.1} parent=1 // pred_check_branch
      %24 = sbr.rel (0) target = $region21
    $region20: #{tpu_custom_call.1} parent=1 // pred_region
      _
    $region21: #{tpu_custom_call.1} parent=1 // pred_fallthru
      _
    // Predicated region
    $region22: #{tpu_custom_call.1} parent=1 // pred_check
      _
    $region23: #{tpu_custom_call.1} parent=1 // pred_check_branch
      %26 = sbr.rel (0) target = $region25
    $region24: #{tpu_custom_call.1} parent=1 // pred_region
      _
    $region25: #{tpu_custom_call.1} parent=1 // pred_fallthru
      _
    // Predicated region
    $region26: #{tpu_custom_call.1} parent=1 // pred_check
      _
    $region27: #{tpu_custom_call.1} parent=1 // pred_check_branch
      %28 = sbr.rel (0) target = $region29
    $region28: #{tpu_custom_call.1} parent=1 // pred_region
      _
    $region29: #{tpu_custom_call.1} parent=1 // pred_fallthru
      _
    %v29 = vld [vmem:[%s0] sm:$0xff]
    %v30 = vld [vmem:[%s0 + $0x8] sm:$0xff]
    %v31 = vld [vmem:[%s0 + $0x10] sm:$0xff]
    %v32 = vld [vmem:[%s0 + $0x18] sm:$0xff]
    %v33 = vld [vmem:[%s0 + $0x20] sm:$0xff]
    %v34 = vld [vmem:[%s0 + $0x28] sm:$0xff]
    %v35 = vld [vmem:[%s0 + $0x30] sm:$0xff]
    %v36 = vld [vmem:[%s0 + $0x38] sm:$0xff]
    %v37 = vld [vmem:[%s1] sm:$0xff]
    %v38 = vld [vmem:[%s1 + $0x8] sm:$0xff]
    %v39 = vld [vmem:[%s1 + $0x10] sm:$0xff]
    %v40 = vld [vmem:[%s1 + $0x18] sm:$0xff]
    %v41 = vld [vmem:[%s1 + $0x20] sm:$0xff]
    %v42 = vld [vmem:[%s1 + $0x28] sm:$0xff]
    %v43 = vld [vmem:[%s1 + $0x30] sm:$0xff]
    %v44 = vld [vmem:[%s1 + $0x38] sm:$0xff]
    %v45 = vld [vmem:[%s1 + $0x40] sm:$0xff]
    %v46 = vld [vmem:[%s1 + $0x48] sm:$0xff]
    %v47 = vld [vmem:[%s1 + $0x50] sm:$0xff]
    %v48 = vld [vmem:[%s1 + $0x58] sm:$0xff]
    %v49 = vld [vmem:[%s1 + $0x60] sm:$0xff]
    %v50 = vld [vmem:[%s1 + $0x68] sm:$0xff]
    %v51 = vld [vmem:[%s1 + $0x70] sm:$0xff]
    %v52 = vld [vmem:[%s1 + $0x78] sm:$0xff]
    %v53 = vld [vmem:[%s2] sm:$0xff]
    %v54 = vld [vmem:[%s2 + $0x8] sm:$0xff]
    %v55 = vld [vmem:[%s2 + $0x10] sm:$0xff]
    %v56 = vld [vmem:[%s2 + $0x18] sm:$0xff]
    %v57 = vld [vmem:[%s2 + $0x20] sm:$0xff]
    %v58 = vld [vmem:[%s2 + $0x28] sm:$0xff]
    %v59 = vld [vmem:[%s2 + $0x30] sm:$0xff]
    %v60 = vld [vmem:[%s2 + $0x38] sm:$0xff]
    %61 = vmatprep.subr.mxu0 0.0
    %62 = vmatpush1.msra.mxu0 %v52
    %63 = vmatprep.subr.mxu0 0.0
    %64 = vmatpush1.msra.mxu0 %v51
    %65 = vmatprep.subr.mxu0 0.0
    %66 = vmatpush1.msra.mxu0 %v50
    %67 = vmatprep.subr.mxu0 0.0
    %68 = vmatpush1.msra.mxu0 %v49
    %69 = vmatprep.subr.mxu0 0.0
    %70 = vmatpush1.msra.mxu0 %v48
    %71 = vmatprep.subr.mxu0 0.0
    %72 = vmatpush1.msra.mxu0 %v47
    %73 = vmatprep.subr.mxu0 0.0
    %74 = vmatpush1.msra.mxu0 %v46
    %75 = vmatprep.subr.mxu0 0.0
    %76 = vmatpush1.msra.mxu0 %v45
    %77 = vmatprep.subr.mxu0 0.0
    %78 = vmatpush1.msra.mxu0 %v44
    %79 = vmatprep.subr.mxu0 0.0
    %80 = vmatpush1.msra.mxu0 %v43
    %81 = vmatprep.subr.mxu0 0.0
    %82 = vmatpush1.msra.mxu0 %v42
    %83 = vmatprep.subr.mxu0 0.0
    %84 = vmatpush1.msra.mxu0 %v41
    %85 = vmatprep.subr.mxu0 0.0
    %86 = vmatpush1.msra.mxu0 %v40
    %87 = vmatprep.subr.mxu0 0.0
    %88 = vmatpush1.msra.mxu0 %v39
    %89 = vmatprep.subr.mxu0 0.0
    %90 = vmatpush1.msra.mxu0 %v38
    %91 = vmatprep.subr.mxu0 0.0
    %92 = vmatpush1.msra.mxu0 %v37
    %93 = vmatprep.subr.mxu0 0.0
    %94 = vmatpush2.msra.mxu0 0.0
    %95 = vmatprep.subr.mxu0 0.0
    %96 = vmatpush2.msra.mxu0 0.0
    %97 = vmatprep.subr.mxu0 0.0
    %98 = vmatpush2.msra.mxu0 0.0
    %99 = vmatprep.subr.mxu0 0.0
    %100 = vmatpush2.msra.mxu0 0.0
    %101 = vmatprep.subr.mxu0 0.0
    %102 = vmatpush2.msra.mxu0 0.0
    %103 = vmatprep.subr.mxu0 0.0
    %104 = vmatpush2.msra.mxu0 0.0
    %105 = vmatprep.subr.mxu0 0.0
    %106 = vmatpush2.msra.mxu0 0.0
    %107 = vmatprep.subr.mxu0 0.0
    %108 = vmatpush2.msra.mxu0 0.0
    %109 = vmatprep.subr.mxu0 0.0
    %110 = vmatpush2.msra.mxu0 0.0
    %111 = vmatprep.subr.mxu0 0.0
    %112 = vmatpush2.msra.mxu0 0.0
    %113 = vmatprep.subr.mxu0 0.0
    %114 = vmatpush2.msra.mxu0 0.0
    %115 = vmatprep.subr.mxu0 0.0
    %116 = vmatpush2.msra.mxu0 0.0
    %117 = vmatprep.subr.mxu0 0.0
    %118 = vmatpush2.msra.mxu0 0.0
    %119 = vmatprep.subr.mxu0 0.0
    %120 = vmatpush2.msra.mxu0 0.0
    %121 = vmatprep.subr.mxu0 0.0
    %122 = vmatpush2.msra.mxu0 0.0
    %123 = vmatprep.subr.mxu0 0.0
    %124 = vmatpush2.msra.mxu0 0.0
    %125 = vmatprep.mubr.f32.mxu0 0.0
    %126 = vmatmul.mubr.f32.gmra.mxu0 %v29
    %v127 = vpop.f32.mrf.mxu0
    %v128 = vadd.f32 %v53, %v127
    %v129 = vpop.f32.mrf.mxu0
    %130 = vmatprep.mubr.f32.mxu0 0.0
    %131 = vmatmul.mubr.f32.gmra.mxu0 %v30
    %v132 = vpop.f32.mrf.mxu0
    %v133 = vadd.f32 %v54, %v132
    %v134 = vpop.f32.mrf.mxu0
    %135 = vmatprep.mubr.f32.mxu0 0.0
    %136 = vmatmul.mubr.f32.gmra.mxu0 %v31
    %v137 = vpop.f32.mrf.mxu0
    %v138 = vadd.f32 %v55, %v137
    %v139 = vpop.f32.mrf.mxu0
    %140 = vmatprep.mubr.f32.mxu0 0.0
    %141 = vmatmul.mubr.f32.gmra.mxu0 %v32
    %v142 = vpop.f32.mrf.mxu0
    %v143 = vadd.f32 %v56, %v142
    %v144 = vpop.f32.mrf.mxu0
    %145 = vmatprep.mubr.f32.mxu0 0.0
    %146 = vmatmul.mubr.f32.gmra.mxu0 %v33
    %v147 = vpop.f32.mrf.mxu0
    %v148 = vadd.f32 %v57, %v147
    %v149 = vpop.f32.mrf.mxu0
    %150 = vmatprep.mubr.f32.mxu0 0.0
    %151 = vmatmul.mubr.f32.gmra.mxu0 %v34
    %v152 = vpop.f32.mrf.mxu0
    %v153 = vadd.f32 %v58, %v152
    %v154 = vpop.f32.mrf.mxu0
    %155 = vmatprep.mubr.f32.mxu0 0.0
    %156 = vmatmul.mubr.f32.gmra.mxu0 %v35
    %v157 = vpop.f32.mrf.mxu0
    %v158 = vadd.f32 %v59, %v157
    %v159 = vpop.f32.mrf.mxu0
    %160 = vmatprep.mubr.f32.mxu0 0.0
    %161 = vmatmul.mubr.f32.gmra.mxu0 %v36
    %v162 = vpop.f32.mrf.mxu0
    %v163 = vadd.f32 %v60, %v162
    %v164 = vpop.f32.mrf.mxu0
    %165 = vdwg.mxu0
    %v166 = vld [vmem:[%s3] sm:$0xff]
    %v167 = vld [vmem:[%s3 + $0x8] sm:$0xff]
    %v168 = vld [vmem:[%s3 + $0x10] sm:$0xff]
    %v169 = vld [vmem:[%s3 + $0x18] sm:$0xff]
    %v170 = vld [vmem:[%s3 + $0x20] sm:$0xff]
    %v171 = vld [vmem:[%s3 + $0x28] sm:$0xff]
    %v172 = vld [vmem:[%s3 + $0x30] sm:$0xff]
    %v173 = vld [vmem:[%s3 + $0x38] sm:$0xff]
    %182 = vrot.lane.b32.xlu0 %v128, 120
    %v183 = vpop.permute.xlu0 %182
    %184 = vrot.lane.b32.xlu0 %v133, 120
    %v185 = vpop.permute.xlu0 %184
    %186 = vrot.lane.b32.xlu0 %v138, 120
    %v187 = vpop.permute.xlu0 %186
    %188 = vrot.lane.b32.xlu0 %v143, 120
    %v189 = vpop.permute.xlu0 %188
    %190 = vrot.lane.b32.xlu0 %v148, 120
    %v191 = vpop.permute.xlu0 %190
    %192 = vrot.lane.b32.xlu0 %v153, 120
    %v193 = vpop.permute.xlu0 %192
    %194 = vrot.lane.b32.xlu0 %v158, 120
    %v195 = vpop.permute.xlu0 %194
    %196 = vrot.lane.b32.xlu0 %v163, 120
    %v197 = vpop.permute.xlu0 %196
    %vm198 = vcmask 64512
    %v199 = vsel %vm198, %v128, 0
    %v201 = vsel %vm198, %v133, 0
    %v203 = vsel %vm198, %v138, 0
    %v205 = vsel %vm198, %v143, 0
    %v207 = vsel %vm198, %v148, 0
    %v209 = vsel %vm198, %v153, 0
    %v211 = vsel %vm198, %v158, 0
    %v213 = vsel %vm198, %v163, 0
    %v215 = vsel %vm198, %v183, 0
    %v217 = vsel %vm198, %v185, 0
    %v219 = vsel %vm198, %v187, 0
    %v221 = vsel %vm198, %v189, 0
    %v223 = vsel %vm198, %v191, 0
    %v225 = vsel %vm198, %v193, 0
    %v227 = vsel %vm198, %v195, 0
    %v229 = vsel %vm198, %v197, 0
    %231 = vmatprep.subr.mxu0 0.0
    %232 = vmatpush1.xpose.msra.mxu0 0.0
    %233 = vmatprep.subr.mxu0 0.0
    %234 = vmatpush1.xpose.msra.mxu0 0.0
    %235 = vmatprep.subr.mxu0 0.0
    %236 = vmatpush1.xpose.msra.mxu0 0.0
    %237 = vmatprep.subr.mxu0 0.0
    %238 = vmatpush1.xpose.msra.mxu0 0.0
    %239 = vmatprep.subr.mxu0 0.0
    %240 = vmatpush1.xpose.msra.mxu0 0.0
    %241 = vmatprep.subr.mxu0 0.0
    %242 = vmatpush1.xpose.msra.mxu0 0.0
    %243 = vmatprep.subr.mxu0 0.0
    %244 = vmatpush1.xpose.msra.mxu0 0.0
    %245 = vmatprep.subr.mxu0 0.0
    %246 = vmatpush1.xpose.msra.mxu0 0.0
    %247 = vmatprep.subr.mxu0 0.0
    %248 = vmatpush1.xpose.msra.mxu0 %v229
    %249 = vmatprep.subr.mxu0 0.0
    %250 = vmatpush1.xpose.msra.mxu0 %v227
    %251 = vmatprep.subr.mxu0 0.0
    %252 = vmatpush1.xpose.msra.mxu0 %v225
    %253 = vmatprep.subr.mxu0 0.0
    %254 = vmatpush1.xpose.msra.mxu0 %v223
    %255 = vmatprep.subr.mxu0 0.0
    %256 = vmatpush1.xpose.msra.mxu0 %v221
    %257 = vmatprep.subr.mxu0 0.0
    %258 = vmatpush1.xpose.msra.mxu0 %v219
    %259 = vmatprep.subr.mxu0 0.0
    %260 = vmatpush1.xpose.msra.mxu0 %v217
    %261 = vmatprep.subr.mxu0 0.0
    %262 = vmatpush1.xpose.msra.mxu0 %v215
    %263 = vmatprep.subr.mxu0 0.0
    %264 = vmatpush2.xpose.msra.mxu0 0.0
    %265 = vmatprep.subr.mxu0 0.0
    %266 = vmatpush2.xpose.msra.mxu0 0.0
    %267 = vmatprep.subr.mxu0 0.0
    %268 = vmatpush2.xpose.msra.mxu0 0.0
    %269 = vmatprep.subr.mxu0 0.0
    %270 = vmatpush2.xpose.msra.mxu0 0.0
    %271 = vmatprep.subr.mxu0 0.0
    %272 = vmatpush2.xpose.msra.mxu0 0.0
    %273 = vmatprep.subr.mxu0 0.0
    %274 = vmatpush2.xpose.msra.mxu0 0.0
    %275 = vmatprep.subr.mxu0 0.0
    %276 = vmatpush2.xpose.msra.mxu0 0.0
    %277 = vmatprep.subr.mxu0 0.0
    %278 = vmatpush2.xpose.msra.mxu0 0.0
    %279 = vmatprep.subr.mxu0 0.0
    %280 = vmatpush2.xpose.msra.mxu0 0.0
    %281 = vmatprep.subr.mxu0 0.0
    %282 = vmatpush2.xpose.msra.mxu0 0.0
    %283 = vmatprep.subr.mxu0 0.0
    %284 = vmatpush2.xpose.msra.mxu0 0.0
    %285 = vmatprep.subr.mxu0 0.0
    %286 = vmatpush2.xpose.msra.mxu0 0.0
    %287 = vmatprep.subr.mxu0 0.0
    %288 = vmatpush2.xpose.msra.mxu0 0.0
    %289 = vmatprep.subr.mxu0 0.0
    %290 = vmatpush2.xpose.msra.mxu0 0.0
    %291 = vmatprep.subr.mxu0 0.0
    %292 = vmatpush2.xpose.msra.mxu0 0.0
    %293 = vmatprep.subr.mxu0 0.0
    %294 = vmatpush2.xpose.msra.mxu0 0.0
    %295 = vmatprep.mubr.f32.mxu0 0.0
    %296 = vmatmul.mubr.f32.gmra.mxu0 %v199
    %v297 = vpop.f32.mrf.mxu0
    %v298 = vadd.f32 %v166, %v297
    %v299 = vpop.f32.mrf.mxu0
    %300 = vmatprep.mubr.f32.mxu0 0.0
    %301 = vmatmul.mubr.f32.gmra.mxu0 %v201
    %v302 = vpop.f32.mrf.mxu0
    %v303 = vadd.f32 %v167, %v302
    %v304 = vpop.f32.mrf.mxu0
    %305 = vmatprep.mubr.f32.mxu0 0.0
    %306 = vmatmul.mubr.f32.gmra.mxu0 %v203
    %v307 = vpop.f32.mrf.mxu0
    %v308 = vadd.f32 %v168, %v307
    %v309 = vpop.f32.mrf.mxu0
    %310 = vmatprep.mubr.f32.mxu0 0.0
    %311 = vmatmul.mubr.f32.gmra.mxu0 %v205
    %v312 = vpop.f32.mrf.mxu0
    %v313 = vadd.f32 %v169, %v312
    %v314 = vpop.f32.mrf.mxu0
    %315 = vmatprep.mubr.f32.mxu0 0.0
    %316 = vmatmul.mubr.f32.gmra.mxu0 %v207
    %v317 = vpop.f32.mrf.mxu0
    %v318 = vadd.f32 %v170, %v317
    %v319 = vpop.f32.mrf.mxu0
    %320 = vmatprep.mubr.f32.mxu0 0.0
    %321 = vmatmul.mubr.f32.gmra.mxu0 %v209
    %v322 = vpop.f32.mrf.mxu0
    %v323 = vadd.f32 %v171, %v322
    %v324 = vpop.f32.mrf.mxu0
    %325 = vmatprep.mubr.f32.mxu0 0.0
    %326 = vmatmul.mubr.f32.gmra.mxu0 %v211
    %v327 = vpop.f32.mrf.mxu0
    %v328 = vadd.f32 %v172, %v327
    %v329 = vpop.f32.mrf.mxu0
    %330 = vmatprep.mubr.f32.mxu0 0.0
    %331 = vmatmul.mubr.f32.gmra.mxu0 %v213
    %v332 = vpop.f32.mrf.mxu0
    %v333 = vadd.f32 %v173, %v332
    %v334 = vpop.f32.mrf.mxu0
    %335 = vdwg.mxu0
    %vm336 = vcmask 523264
    %v337 = vsel %vm336, %v298, -inf
    %338 = vmax.xlane.f32.xlu0 %v337
    %v339 = vpop.xlane.xlu0 %338
    %v340 = vsel %vm336, %v303, -inf
    %341 = vmax.xlane.f32.xlu0 %v340
    %v342 = vpop.xlane.xlu0 %341
    %v343 = vsel %vm336, %v308, -inf
    %344 = vmax.xlane.f32.xlu0 %v343
    %v345 = vpop.xlane.xlu0 %344
    %v346 = vsel %vm336, %v313, -inf
    %347 = vmax.xlane.f32.xlu0 %v346
    %v348 = vpop.xlane.xlu0 %347
    %v349 = vsel %vm336, %v318, -inf
    %350 = vmax.xlane.f32.xlu0 %v349
    %v351 = vpop.xlane.xlu0 %350
    %v352 = vsel %vm336, %v323, -inf
    %353 = vmax.xlane.f32.xlu0 %v352
    %v354 = vpop.xlane.xlu0 %353
    %v355 = vsel %vm336, %v328, -inf
    %356 = vmax.xlane.f32.xlu0 %v355
    %v357 = vpop.xlane.xlu0 %356
    %v358 = vsel %vm336, %v333, -inf
    %359 = vmax.xlane.f32.xlu0 %v358
    %v360 = vpop.xlane.xlu0 %359
    %v361 = vsub.f32 %v298, %v339
    %v362 = vsub.f32 %v303, %v342
    %v363 = vsub.f32 %v308, %v345
    %v364 = vsub.f32 %v313, %v348
    %v365 = vsub.f32 %v318, %v351
    %v366 = vsub.f32 %v323, %v354
    %v367 = vsub.f32 %v328, %v357
    %v368 = vsub.f32 %v333, %v360
    %v369 = vmul.f32 %v361, 1.442695
    %v370 = vpow.pop %v369
    %v371 = vmul.f32 %v362, 1.442695
    %v372 = vpow.pop %v371
    %v373 = vmul.f32 %v363, 1.442695
    %v374 = vpow.pop %v373
    %v375 = vmul.f32 %v364, 1.442695
    %v376 = vpow.pop %v375
    %v377 = vmul.f32 %v365, 1.442695
    %v378 = vpow.pop %v377
    %v379 = vmul.f32 %v366, 1.442695
    %v380 = vpow.pop %v379
    %v381 = vmul.f32 %v367, 1.442695
    %v382 = vpow.pop %v381
    %v383 = vmul.f32 %v368, 1.442695
    %v384 = vpow.pop %v383
    %v385 = vsel %vm336, %v370, 0.0
    %386 = vadd.xlane.f32.xlu0 %v385
    %v387 = vpop.xlane.xlu0 %386
    %v388 = vsel %vm336, %v372, 0.0
    %389 = vadd.xlane.f32.xlu0 %v388
    %v390 = vpop.xlane.xlu0 %389
    %v391 = vsel %vm336, %v374, 0.0
    %392 = vadd.xlane.f32.xlu0 %v391
    %v393 = vpop.xlane.xlu0 %392
    %v394 = vsel %vm336, %v376, 0.0
    %395 = vadd.xlane.f32.xlu0 %v394
    %v396 = vpop.xlane.xlu0 %395
    %v397 = vsel %vm336, %v378, 0.0
    %398 = vadd.xlane.f32.xlu0 %v397
    %v399 = vpop.xlane.xlu0 %398
    %v400 = vsel %vm336, %v380, 0.0
    %401 = vadd.xlane.f32.xlu0 %v400
    %v402 = vpop.xlane.xlu0 %401
    %v403 = vsel %vm336, %v382, 0.0
    %404 = vadd.xlane.f32.xlu0 %v403
    %v405 = vpop.xlane.xlu0 %404
    %v406 = vsel %vm336, %v384, 0.0
    %407 = vadd.xlane.f32.xlu0 %v406
    %v408 = vpop.xlane.xlu0 %407
    %v409 = vrcp.pop %v387
    %v410 = vrcp.pop %v390
    %v411 = vrcp.pop %v393
    %v412 = vrcp.pop %v396
    %v413 = vrcp.pop %v399
    %v414 = vrcp.pop %v402
    %v415 = vrcp.pop %v405
    %v416 = vrcp.pop %v408
    %v417 = vmul.f32 %v387, %v409
    %v418 = vmul.f32 %v390, %v410
    %v419 = vmul.f32 %v393, %v411
    %v420 = vmul.f32 %v396, %v412
    %v421 = vmul.f32 %v399, %v413
    %v422 = vmul.f32 %v402, %v414
    %v423 = vmul.f32 %v405, %v415
    %v424 = vmul.f32 %v408, %v416
    %v425 = vsub.f32 2.0, %v417
    %v426 = vsub.f32 2.0, %v418
    %v427 = vsub.f32 2.0, %v419
    %v428 = vsub.f32 2.0, %v420
    %v429 = vsub.f32 2.0, %v421
    %v430 = vsub.f32 2.0, %v422
    %v431 = vsub.f32 2.0, %v423
    %v432 = vsub.f32 2.0, %v424
    %v433 = vmul.f32 %v409, %v425
    %v434 = vmul.f32 %v410, %v426
    %v435 = vmul.f32 %v411, %v427
    %v436 = vmul.f32 %v412, %v428
    %v437 = vmul.f32 %v413, %v429
    %v438 = vmul.f32 %v414, %v430
    %v439 = vmul.f32 %v415, %v431
    %v440 = vmul.f32 %v416, %v432
    %v441 = vmul.f32 %v370, %v433
    %v442 = vmul.f32 %v372, %v434
    %v443 = vmul.f32 %v374, %v435
    %v444 = vmul.f32 %v376, %v436
    %v445 = vmul.f32 %v378, %v437
    %v446 = vmul.f32 %v380, %v438
    %v447 = vmul.f32 %v382, %v439
    %v448 = vmul.f32 %v384, %v440
    %449 = vrot.lane.b32.xlu0 %v128, 112
    %v450 = vpop.permute.xlu0 %449
    %451 = vrot.lane.b32.xlu0 %v133, 112
    %v452 = vpop.permute.xlu0 %451
    %453 = vrot.lane.b32.xlu0 %v138, 112
    %v454 = vpop.permute.xlu0 %453
    %455 = vrot.lane.b32.xlu0 %v143, 112
    %v456 = vpop.permute.xlu0 %455
    %457 = vrot.lane.b32.xlu0 %v148, 112
    %v458 = vpop.permute.xlu0 %457
    %459 = vrot.lane.b32.xlu0 %v153, 112
    %v460 = vpop.permute.xlu0 %459
    %461 = vrot.lane.b32.xlu0 %v158, 112
    %v462 = vpop.permute.xlu0 %461
    %463 = vrot.lane.b32.xlu0 %v163, 112
    %v464 = vpop.permute.xlu0 %463
    %v474 = vsel %vm336, %v441, 0
    %v477 = vsel %vm336, %v442, 0
    %v480 = vsel %vm336, %v443, 0
    %v483 = vsel %vm336, %v444, 0
    %v486 = vsel %vm336, %v445, 0
    %v489 = vsel %vm336, %v446, 0
    %v492 = vsel %vm336, %v447, 0
    %v495 = vsel %vm336, %v448, 0
    %497 = vmatprep.subr.mxu0 0.0
    %498 = vmatpush1.msra.mxu0 0.0
    %499 = vmatprep.subr.mxu0 0.0
    %500 = vmatpush1.msra.mxu0 0.0
    %501 = vmatprep.subr.mxu0 0.0
    %502 = vmatpush1.msra.mxu0 0.0
    %503 = vmatprep.subr.mxu0 0.0
    %504 = vmatpush1.msra.mxu0 0.0
    %505 = vmatprep.subr.mxu0 0.0
    %506 = vmatpush1.msra.mxu0 0.0
    %507 = vmatprep.subr.mxu0 0.0
    %508 = vmatpush1.msra.mxu0 0.0
    %509 = vmatprep.subr.mxu0 0.0
    %510 = vmatpush1.msra.mxu0 0.0
    %511 = vmatprep.subr.mxu0 0.0
    %512 = vmatpush1.msra.mxu0 0.0
    %513 = vmatprep.subr.mxu0 0.0
    %514 = vmatpush1.msra.mxu0 %v464
    %515 = vmatprep.subr.mxu0 0.0
    %516 = vmatpush1.msra.mxu0 %v462
    %517 = vmatprep.subr.mxu0 0.0
    %518 = vmatpush1.msra.mxu0 %v460
    %519 = vmatprep.subr.mxu0 0.0
    %520 = vmatpush1.msra.mxu0 %v458
    %521 = vmatprep.subr.mxu0 0.0
    %522 = vmatpush1.msra.mxu0 %v456
    %523 = vmatprep.subr.mxu0 0.0
    %524 = vmatpush1.msra.mxu0 %v454
    %525 = vmatprep.subr.mxu0 0.0
    %526 = vmatpush1.msra.mxu0 %v452
    %527 = vmatprep.subr.mxu0 0.0
    %528 = vmatpush1.msra.mxu0 %v450
    %529 = vmatprep.subr.mxu0 0.0
    %530 = vmatpush2.msra.mxu0 0.0
    %531 = vmatprep.subr.mxu0 0.0
    %532 = vmatpush2.msra.mxu0 0.0
    %533 = vmatprep.subr.mxu0 0.0
    %534 = vmatpush2.msra.mxu0 0.0
    %535 = vmatprep.subr.mxu0 0.0
    %536 = vmatpush2.msra.mxu0 0.0
    %537 = vmatprep.subr.mxu0 0.0
    %538 = vmatpush2.msra.mxu0 0.0
    %539 = vmatprep.subr.mxu0 0.0
    %540 = vmatpush2.msra.mxu0 0.0
    %541 = vmatprep.subr.mxu0 0.0
    %542 = vmatpush2.msra.mxu0 0.0
    %543 = vmatprep.subr.mxu0 0.0
    %544 = vmatpush2.msra.mxu0 0.0
    %545 = vmatprep.subr.mxu0 0.0
    %546 = vmatpush2.msra.mxu0 0.0
    %547 = vmatprep.subr.mxu0 0.0
    %548 = vmatpush2.msra.mxu0 0.0
    %549 = vmatprep.subr.mxu0 0.0
    %550 = vmatpush2.msra.mxu0 0.0
    %551 = vmatprep.subr.mxu0 0.0
    %552 = vmatpush2.msra.mxu0 0.0
    %553 = vmatprep.subr.mxu0 0.0
    %554 = vmatpush2.msra.mxu0 0.0
    %555 = vmatprep.subr.mxu0 0.0
    %556 = vmatpush2.msra.mxu0 0.0
    %557 = vmatprep.subr.mxu0 0.0
    %558 = vmatpush2.msra.mxu0 0.0
    %559 = vmatprep.subr.mxu0 0.0
    %560 = vmatpush2.msra.mxu0 0.0
    %561 = vmatprep.mubr.f32.mxu0 0.0
    %562 = vmatmul.mubr.f32.gmra.mxu0 %v474
    %v563 = vpop.f32.mrf.mxu0
    %v564 = vadd.f32 0.0, %v563
    %v565 = vpop.f32.mrf.mxu0
    %566 = vmatprep.mubr.f32.mxu0 0.0
    %567 = vmatmul.mubr.f32.gmra.mxu0 %v477
    %v568 = vpop.f32.mrf.mxu0
    %v569 = vadd.f32 0.0, %v568
    %v570 = vpop.f32.mrf.mxu0
    %571 = vmatprep.mubr.f32.mxu0 0.0
    %572 = vmatmul.mubr.f32.gmra.mxu0 %v480
    %v573 = vpop.f32.mrf.mxu0
    %v574 = vadd.f32 0.0, %v573
    %v575 = vpop.f32.mrf.mxu0
    %576 = vmatprep.mubr.f32.mxu0 0.0
    %577 = vmatmul.mubr.f32.gmra.mxu0 %v483
    %v578 = vpop.f32.mrf.mxu0
    %v579 = vadd.f32 0.0, %v578
    %v580 = vpop.f32.mrf.mxu0
    %581 = vmatprep.mubr.f32.mxu0 0.0
    %582 = vmatmul.mubr.f32.gmra.mxu0 %v486
    %v583 = vpop.f32.mrf.mxu0
    %v584 = vadd.f32 0.0, %v583
    %v585 = vpop.f32.mrf.mxu0
    %586 = vmatprep.mubr.f32.mxu0 0.0
    %587 = vmatmul.mubr.f32.gmra.mxu0 %v489
    %v588 = vpop.f32.mrf.mxu0
    %v589 = vadd.f32 0.0, %v588
    %v590 = vpop.f32.mrf.mxu0
    %591 = vmatprep.mubr.f32.mxu0 0.0
    %592 = vmatmul.mubr.f32.gmra.mxu0 %v492
    %v593 = vpop.f32.mrf.mxu0
    %v594 = vadd.f32 0.0, %v593
    %v595 = vpop.f32.mrf.mxu0
    %596 = vmatprep.mubr.f32.mxu0 0.0
    %597 = vmatmul.mubr.f32.gmra.mxu0 %v495
    %v598 = vpop.f32.mrf.mxu0
    %v599 = vadd.f32 0.0, %v598
    %v600 = vpop.f32.mrf.mxu0
    %601 = vdwg.mxu0
    %v602 = vld [vmem:[%s5] sm:$0xff]
    %v603 = vld [vmem:[%s5 + $0x8] sm:$0xff]
    %v604 = vld [vmem:[%s6] sm:$0x1]
    %v606 = vlaneseq
    %v607 = vshrl.u32 %v606, 7
    %v608 = vsub.s32 0, %v607
    %v609 = vrot.slane %v604, %v608
    %v612 = vsel %vm336, %v602, 0
    %v615 = vsel %vm336, %v603, 0
    %617 = vmatprep.subr.mxu0 0.0
    %618 = vmatpush1.msra.mxu0 0.0
    %619 = vmatprep.subr.mxu0 0.0
    %620 = vmatpush1.msra.mxu0 0.0
    %621 = vmatprep.subr.mxu0 0.0
    %622 = vmatpush1.msra.mxu0 0.0
    %623 = vmatprep.subr.mxu0 0.0
    %624 = vmatpush1.msra.mxu0 0.0
    %625 = vmatprep.subr.mxu0 0.0
    %626 = vmatpush1.msra.mxu0 0.0
    %627 = vmatprep.subr.mxu0 0.0
    %628 = vmatpush1.msra.mxu0 0.0
    %629 = vmatprep.subr.mxu0 0.0
    %630 = vmatpush1.msra.mxu0 0.0
    %631 = vmatprep.subr.mxu0 0.0
    %632 = vmatpush1.msra.mxu0 0.0
    %633 = vmatprep.subr.mxu0 0.0
    %634 = vmatpush1.msra.mxu0 %v599
    %635 = vmatprep.subr.mxu0 0.0
    %636 = vmatpush1.msra.mxu0 %v594
    %637 = vmatprep.subr.mxu0 0.0
    %638 = vmatpush1.msra.mxu0 %v589
    %639 = vmatprep.subr.mxu0 0.0
    %640 = vmatpush1.msra.mxu0 %v584
    %641 = vmatprep.subr.mxu0 0.0
    %642 = vmatpush1.msra.mxu0 %v579
    %643 = vmatprep.subr.mxu0 0.0
    %644 = vmatpush1.msra.mxu0 %v574
    %645 = vmatprep.subr.mxu0 0.0
    %646 = vmatpush1.msra.mxu0 %v569
    %647 = vmatprep.subr.mxu0 0.0
    %648 = vmatpush1.msra.mxu0 %v564
    %649 = vmatprep.subr.mxu0 0.0
    %650 = vmatpush2.msra.mxu0 0.0
    %651 = vmatprep.subr.mxu0 0.0
    %652 = vmatpush2.msra.mxu0 0.0
    %653 = vmatprep.subr.mxu0 0.0
    %654 = vmatpush2.msra.mxu0 0.0
    %655 = vmatprep.subr.mxu0 0.0
    %656 = vmatpush2.msra.mxu0 0.0
    %657 = vmatprep.subr.mxu0 0.0
    %658 = vmatpush2.msra.mxu0 0.0
    %659 = vmatprep.subr.mxu0 0.0
    %660 = vmatpush2.msra.mxu0 0.0
    %661 = vmatprep.subr.mxu0 0.0
    %662 = vmatpush2.msra.mxu0 0.0
    %663 = vmatprep.subr.mxu0 0.0
    %664 = vmatpush2.msra.mxu0 0.0
    %665 = vmatprep.subr.mxu0 0.0
    %666 = vmatpush2.msra.mxu0 0.0
    %667 = vmatprep.subr.mxu0 0.0
    %668 = vmatpush2.msra.mxu0 0.0
    %669 = vmatprep.subr.mxu0 0.0
    %670 = vmatpush2.msra.mxu0 0.0
    %671 = vmatprep.subr.mxu0 0.0
    %672 = vmatpush2.msra.mxu0 0.0
    %673 = vmatprep.subr.mxu0 0.0
    %674 = vmatpush2.msra.mxu0 0.0
    %675 = vmatprep.subr.mxu0 0.0
    %676 = vmatpush2.msra.mxu0 0.0
    %677 = vmatprep.subr.mxu0 0.0
    %678 = vmatpush2.msra.mxu0 0.0
    %679 = vmatprep.subr.mxu0 0.0
    %680 = vmatpush2.msra.mxu0 0.0
    %681 = vmatprep.mubr.f32.mxu0 0.0
    %682 = vmatmul.mubr.f32.gmra.mxu0 %v612
    %v683 = vpop.f32.mrf.mxu0
    %v684 = vadd.f32 %v609, %v683
    %v685 = vpop.f32.mrf.mxu0
    %686 = vmatprep.mubr.f32.mxu0 0.0
    %687 = vmatmul.mubr.f32.gmra.mxu0 %v615
    %v688 = vpop.f32.mrf.mxu0
    %v689 = vadd.f32 %v609, %v688
    %v690 = vpop.f32.mrf.mxu0
    %691 = vdwg.mxu0
    %vm692 = vcmask 261120
    %693 = vst.msk [vmem:[#allocation2] sm:$0xff] %vm692, %v684
    %694 = vst.msk [vmem:[#allocation2 + $0x8] sm:$0xff] %vm692, %v689
    %v695 = vld [vmem:[%s4] sm:$0xff]
    %v696 = vld [vmem:[%s4 + $0x8] sm:$0xff]
    %v697 = vld [vmem:[%s4 + $0x10] sm:$0xff]
    %v698 = vld [vmem:[%s4 + $0x18] sm:$0xff]
    %v699 = vld [vmem:[%s4 + $0x20] sm:$0xff]
    %v700 = vld [vmem:[%s4 + $0x28] sm:$0xff]
    %v701 = vld [vmem:[%s4 + $0x30] sm:$0xff]
    %v702 = vld [vmem:[%s4 + $0x38] sm:$0xff]
    %703 = vmatprep.subr.mxu0 0.0
    %704 = vmatpush1.msra.mxu0 0.0
    %705 = vmatprep.subr.mxu0 0.0
    %706 = vmatpush1.msra.mxu0 0.0
    %707 = vmatprep.subr.mxu0 0.0
    %708 = vmatpush1.msra.mxu0 0.0
    %709 = vmatprep.subr.mxu0 0.0
    %710 = vmatpush1.msra.mxu0 0.0
    %711 = vmatprep.subr.mxu0 0.0
    %712 = vmatpush1.msra.mxu0 0.0
    %713 = vmatprep.subr.mxu0 0.0
    %714 = vmatpush1.msra.mxu0 0.0
    %715 = vmatprep.subr.mxu0 0.0
    %716 = vmatpush1.msra.mxu0 0.0
    %717 = vmatprep.subr.mxu0 0.0
    %718 = vmatpush1.msra.mxu0 0.0
    %719 = vmatprep.subr.mxu0 0.0
    %720 = vmatpush1.msra.mxu0 %v702
    %721 = vmatprep.subr.mxu0 0.0
    %722 = vmatpush1.msra.mxu0 %v701
    %723 = vmatprep.subr.mxu0 0.0
    %724 = vmatpush1.msra.mxu0 %v700
    %725 = vmatprep.subr.mxu0 0.0
    %726 = vmatpush1.msra.mxu0 %v699
    %727 = vmatprep.subr.mxu0 0.0
    %728 = vmatpush1.msra.mxu0 %v698
    %729 = vmatprep.subr.mxu0 0.0
    %730 = vmatpush1.msra.mxu0 %v697
    %731 = vmatprep.subr.mxu0 0.0
    %732 = vmatpush1.msra.mxu0 %v696
    %733 = vmatprep.subr.mxu0 0.0
    %734 = vmatpush1.msra.mxu0 %v695
    %735 = vmatprep.subr.mxu0 0.0
    %736 = vmatpush2.msra.mxu0 0.0
    %737 = vmatprep.subr.mxu0 0.0
    %738 = vmatpush2.msra.mxu0 0.0
    %739 = vmatprep.subr.mxu0 0.0
    %740 = vmatpush2.msra.mxu0 0.0
    %741 = vmatprep.subr.mxu0 0.0
    %742 = vmatpush2.msra.mxu0 0.0
    %743 = vmatprep.subr.mxu0 0.0
    %744 = vmatpush2.msra.mxu0 0.0
    %745 = vmatprep.subr.mxu0 0.0
    %746 = vmatpush2.msra.mxu0 0.0
    %747 = vmatprep.subr.mxu0 0.0
    %748 = vmatpush2.msra.mxu0 0.0
    %749 = vmatprep.subr.mxu0 0.0
    %750 = vmatpush2.msra.mxu0 0.0
    %751 = vmatprep.subr.mxu0 0.0
    %752 = vmatpush2.msra.mxu0 0.0
    %753 = vmatprep.subr.mxu0 0.0
    %754 = vmatpush2.msra.mxu0 0.0
    %755 = vmatprep.subr.mxu0 0.0
    %756 = vmatpush2.msra.mxu0 0.0
    %757 = vmatprep.subr.mxu0 0.0
    %758 = vmatpush2.msra.mxu0 0.0
    %759 = vmatprep.subr.mxu0 0.0
    %760 = vmatpush2.msra.mxu0 0.0
    %761 = vmatprep.subr.mxu0 0.0
    %762 = vmatpush2.msra.mxu0 0.0
    %763 = vmatprep.subr.mxu0 0.0
    %764 = vmatpush2.msra.mxu0 0.0
    %765 = vmatprep.subr.mxu0 0.0
    %766 = vmatpush2.msra.mxu0 0.0
    %767 = vmatprep.mubr.f32.mxu0 0.0
    %768 = vmatmul.mubr.f32.gmra.mxu0 %v474
    %v769 = vpop.f32.mrf.mxu0
    %v770 = vadd.f32 0.0, %v769
    %v771 = vpop.f32.mrf.mxu0
    %772 = vmatprep.mubr.f32.mxu0 0.0
    %773 = vmatmul.mubr.f32.gmra.mxu0 %v477
    %v774 = vpop.f32.mrf.mxu0
    %v775 = vadd.f32 0.0, %v774
    %v776 = vpop.f32.mrf.mxu0
    %777 = vmatprep.mubr.f32.mxu0 0.0
    %778 = vmatmul.mubr.f32.gmra.mxu0 %v480
    %v779 = vpop.f32.mrf.mxu0
    %v780 = vadd.f32 0.0, %v779
    %v781 = vpop.f32.mrf.mxu0
    %782 = vmatprep.mubr.f32.mxu0 0.0
    %783 = vmatmul.mubr.f32.gmra.mxu0 %v483
    %v784 = vpop.f32.mrf.mxu0
    %v785 = vadd.f32 0.0, %v784
    %v786 = vpop.f32.mrf.mxu0
    %787 = vmatprep.mubr.f32.mxu0 0.0
    %788 = vmatmul.mubr.f32.gmra.mxu0 %v486
    %v789 = vpop.f32.mrf.mxu0
    %v790 = vadd.f32 0.0, %v789
    %v791 = vpop.f32.mrf.mxu0
    %792 = vmatprep.mubr.f32.mxu0 0.0
    %793 = vmatmul.mubr.f32.gmra.mxu0 %v489
    %v794 = vpop.f32.mrf.mxu0
    %v795 = vadd.f32 0.0, %v794
    %v796 = vpop.f32.mrf.mxu0
    %797 = vmatprep.mubr.f32.mxu0 0.0
    %798 = vmatmul.mubr.f32.gmra.mxu0 %v492
    %v799 = vpop.f32.mrf.mxu0
    %v800 = vadd.f32 0.0, %v799
    %v801 = vpop.f32.mrf.mxu0
    %802 = vmatprep.mubr.f32.mxu0 0.0
    %803 = vmatmul.mubr.f32.gmra.mxu0 %v495
    %v804 = vpop.f32.mrf.mxu0
    %v805 = vadd.f32 0.0, %v804
    %v806 = vpop.f32.mrf.mxu0
    %807 = vdwg.mxu0
    %808 = vmatprep.subr.mxu0 0.0
    %809 = vmatpush1.msra.mxu0 0.0
    %810 = vmatprep.subr.mxu0 0.0
    %811 = vmatpush1.msra.mxu0 0.0
    %812 = vmatprep.subr.mxu0 0.0
    %813 = vmatpush1.msra.mxu0 0.0
    %814 = vmatprep.subr.mxu0 0.0
    %815 = vmatpush1.msra.mxu0 0.0
    %816 = vmatprep.subr.mxu0 0.0
    %817 = vmatpush1.msra.mxu0 0.0
    %818 = vmatprep.subr.mxu0 0.0
    %819 = vmatpush1.msra.mxu0 0.0
    %820 = vmatprep.subr.mxu0 0.0
    %821 = vmatpush1.msra.mxu0 0.0
    %822 = vmatprep.subr.mxu0 0.0
    %823 = vmatpush1.msra.mxu0 0.0
    %824 = vmatprep.subr.mxu0 0.0
    %825 = vmatpush1.msra.mxu0 %v805
    %826 = vmatprep.subr.mxu0 0.0
    %827 = vmatpush1.msra.mxu0 %v800
    %828 = vmatprep.subr.mxu0 0.0
    %829 = vmatpush1.msra.mxu0 %v795
    %830 = vmatprep.subr.mxu0 0.0
    %831 = vmatpush1.msra.mxu0 %v790
    %832 = vmatprep.subr.mxu0 0.0
    %833 = vmatpush1.msra.mxu0 %v785
    %834 = vmatprep.subr.mxu0 0.0
    %835 = vmatpush1.msra.mxu0 %v780
    %836 = vmatprep.subr.mxu0 0.0
    %837 = vmatpush1.msra.mxu0 %v775
    %838 = vmatprep.subr.mxu0 0.0
    %839 = vmatpush1.msra.mxu0 %v770
    %840 = vmatprep.subr.mxu0 0.0
    %841 = vmatpush2.msra.mxu0 0.0
    %842 = vmatprep.subr.mxu0 0.0
    %843 = vmatpush2.msra.mxu0 0.0
    %844 = vmatprep.subr.mxu0 0.0
    %845 = vmatpush2.msra.mxu0 0.0
    %846 = vmatprep.subr.mxu0 0.0
    %847 = vmatpush2.msra.mxu0 0.0
    %848 = vmatprep.subr.mxu0 0.0
    %849 = vmatpush2.msra.mxu0 0.0
    %850 = vmatprep.subr.mxu0 0.0
    %851 = vmatpush2.msra.mxu0 0.0
    %852 = vmatprep.subr.mxu0 0.0
    %853 = vmatpush2.msra.mxu0 0.0
    %854 = vmatprep.subr.mxu0 0.0
    %855 = vmatpush2.msra.mxu0 0.0
    %856 = vmatprep.subr.mxu0 0.0
    %857 = vmatpush2.msra.mxu0 0.0
    %858 = vmatprep.subr.mxu0 0.0
    %859 = vmatpush2.msra.mxu0 0.0
    %860 = vmatprep.subr.mxu0 0.0
    %861 = vmatpush2.msra.mxu0 0.0
    %862 = vmatprep.subr.mxu0 0.0
    %863 = vmatpush2.msra.mxu0 0.0
    %864 = vmatprep.subr.mxu0 0.0
    %865 = vmatpush2.msra.mxu0 0.0
    %866 = vmatprep.subr.mxu0 0.0
    %867 = vmatpush2.msra.mxu0 0.0
    %868 = vmatprep.subr.mxu0 0.0
    %869 = vmatpush2.msra.mxu0 0.0
    %870 = vmatprep.subr.mxu0 0.0
    %871 = vmatpush2.msra.mxu0 0.0
    %872 = vmatprep.mubr.f32.mxu0 0.0
    %873 = vmatmul.mubr.f32.gmra.mxu0 %v612
    %v874 = vpop.f32.mrf.mxu0
    %v875 = vadd.f32 0.0, %v874
    %v876 = vpop.f32.mrf.mxu0
    %877 = vmatprep.mubr.f32.mxu0 0.0
    %878 = vmatmul.mubr.f32.gmra.mxu0 %v615
    %v879 = vpop.f32.mrf.mxu0
    %v880 = vadd.f32 0.0, %v879
    %v881 = vpop.f32.mrf.mxu0
    %882 = vdwg.mxu0
    %883 = vst.msk [vmem:[%s8] sm:$0xff] %vm198, %v875
    %884 = vst.msk [vmem:[%s8 + $0x8] sm:$0xff] %vm198, %v880
    // Predicated region
    $region30: #{tpu_custom_call.1} parent=1 // pred_check
      _
    $region31: #{tpu_custom_call.1} parent=1 // pred_check_branch
      %886 = sbr.rel (0) target = $region33
    $region32: #{tpu_custom_call.1} parent=1 // pred_region
      %s888 = ssub.s32 256, 256
      %889 = vsyncadd [#allocation3], %s888
      %s890 = sshll.u32 [#allocation2], 4
      %s891 = int_to_ptr.vmem [resolvable:$true] %s890
      %896 = dma.vmem_to_hbm [thread:$0]  %s891, 256, %s7, [#allocation3], 128, 128, 8
    $region33: #{tpu_custom_call.1} parent=1 // pred_fallthru
      _
    // Predicated region
    $region34: #{tpu_custom_call.1} parent=1 // pred_check
      _
    $region35: #{tpu_custom_call.1} parent=1 // pred_check_branch
      %898 = sbr.rel (0) target = $region37
    $region36: #{tpu_custom_call.1} parent=1 // pred_region
      _
    $region37: #{tpu_custom_call.1} parent=1 // pred_fallthru
      _
    // Predicated region
    $region38: #{tpu_custom_call.1} parent=1 // pred_check
      _
    $region39: #{tpu_custom_call.1} parent=1 // pred_check_branch
      %900 = sbr.rel (0) target = $region41
    $region40: #{tpu_custom_call.1} parent=1 // pred_region
      %901 = dma.done [#allocation3], 256
    $region41: #{tpu_custom_call.1} parent=1 // pred_fallthru
      _
    // Predicated region
    $region42: #{tpu_custom_call.1} parent=1 // pred_check
      _
    $region43: #{tpu_custom_call.1} parent=1 // pred_check_branch
      %903 = sbr.rel (0) target = $region45
    $region44: #{tpu_custom_call.1} parent=1 // pred_region
      _
    $region45: #{tpu_custom_call.1} parent=1 // pred_fallthru
      _
    %904 = vsyncpa [#allocation3], 1

</llo_original>
